<compile_context>
chip_gen: v7x
topology: tpu7x:2x2x1
jax: 0.10.0
libtpu: 0.0.40
codegen_flags: <defaults>
</compile_context>

<pallas_src>
import jax
import jax.numpy as jnp
from jax import lax
from jax.experimental import pallas as pl
from jax.experimental.pallas import tpu as pltpu


# ---------------------------------------------------------------------------
# Kernels
# ---------------------------------------------------------------------------
def _stats_kernel(x_ref, sum_ref, sumsq_ref):
    """Phase 1: accumulate per-channel sum and sum-of-squares (f32)."""
    @pl.when(pl.program_id(0) == 0)
    def _init():
        sum_ref[...] = jnp.zeros_like(sum_ref)
        sumsq_ref[...] = jnp.zeros_like(sumsq_ref)

    xf = x_ref[...].astype(jnp.float32)                     # (TN, C, L) tile
    # reduce lanes (L) then the leading batch-tile dim; stay >= 2-D throughout
    s = jnp.sum(jnp.sum(xf, axis=2, keepdims=True), axis=0, keepdims=True)
    sq = jnp.sum(jnp.sum(xf * xf, axis=2, keepdims=True), axis=0, keepdims=True)
    sum_ref[...] += s                                       # (1, C, 1)
    sumsq_ref[...] += sq                                    # (1, C, 1)


def _normalize_kernel(x_ref, scale_ref, shift_ref, o_ref):
    """Phase 2: y = x * scale + shift (per-channel scale/shift, pre-fused)."""
    y = x_ref[...].astype(jnp.float32) * scale_ref[...] + shift_ref[...]
    o_ref[...] = y.astype(o_ref.dtype)


# ---------------------------------------------------------------------------
# Wrapper
# ---------------------------------------------------------------------------
def _pick_tile_n(n, c, l, itemsize, target_bytes=2 << 20):
    """Largest divisor of n whose (tn, C, L) tile is <= ~target_bytes."""
    per_row = max(c * l * itemsize, 1)
    cap = max(1, min(n, target_bytes // per_row))
    for tn in range(int(cap), 0, -1):
        if n % tn == 0:
            return tn
    return 1


def meta_batch_norm1d(x, weight, bias, eps=1e-5):
    """x: (N, C) or (N, C, L); weight/bias: (C,). Training-mode batch norm."""
    orig_ndim = x.ndim
    x3 = x[:, :, None] if orig_ndim == 2 else x
    N, C, L = x3.shape
    tn = _pick_tile_n(N, C, L, x3.dtype.itemsize)
    num_tiles = N // tn

    # ---- Phase 1: per-channel sum / sum-of-squares (single pass over x) ----
    sum_, sumsq = pl.pallas_call(
        _stats_kernel,
        out_shape=(jax.ShapeDtypeStruct((1, C, 1), jnp.float32),
                   jax.ShapeDtypeStruct((1, C, 1), jnp.float32)),
        grid=(num_tiles,),
        in_specs=[pl.BlockSpec((tn, C, L), lambda i: (i, 0, 0))],
        out_specs=(pl.BlockSpec((1, C, 1), lambda i: (0, 0, 0)),
                   pl.BlockSpec((1, C, 1), lambda i: (0, 0, 0))),
        compiler_params=pltpu.CompilerParams(
            dimension_semantics=("arbitrary",)),
    )(x3)

    # ---- Fold affine into one per-channel scale/shift (tiny (1,C,1) math) ---
    cnt = jnp.float32(N * L)
    mean = sum_ / cnt
    var = jnp.maximum(sumsq / cnt - mean * mean, 0.0)       # biased variance
    inv = lax.rsqrt(var + jnp.float32(eps))
    w = weight.astype(jnp.float32)[None, :, None]
    b = bias.astype(jnp.float32)[None, :, None]
    scale = w * inv                                         # (1, C, 1)
    shift = b - mean * scale                                # (1, C, 1)

    # ---- Phase 2: normalize, tiled + pipelined, megacore-parallel ----------
    out3 = pl.pallas_call(
        _normalize_kernel,
        out_shape=jax.ShapeDtypeStruct((N, C, L), x.dtype),
        grid=(num_tiles,),
        in_specs=[pl.BlockSpec((tn, C, L), lambda i: (i, 0, 0)),
                  pl.BlockSpec((1, C, 1), lambda i: (0, 0, 0)),
                  pl.BlockSpec((1, C, 1), lambda i: (0, 0, 0))],
        out_specs=pl.BlockSpec((tn, C, L), lambda i: (i, 0, 0)),
        compiler_params=pltpu.CompilerParams(
            dimension_semantics=("parallel",)),
    )(x3, scale, shift)

    return out3[:, :, 0] if orig_ndim == 2 else out3


# ---------------------------------------------------------------------------
# Pure-JAX reference (training-mode BatchNorm1d)
# ---------------------------------------------------------------------------
def _reference_bn1d(x, weight, bias, eps=1e-5):
    xf = x.astype(jnp.float32)
    squeeze = False
    if xf.ndim == 2:
        xf = xf[:, :, None]
        squeeze = True
    mean = jnp.mean(xf, axis=(0, 2), keepdims=True)
    var = jnp.mean((xf - mean) ** 2, axis=(0, 2), keepdims=True)
    y = (xf - mean) / jnp.sqrt(var + eps)
    y = y * weight[None, :, None] + bias[None, :, None]
    if squeeze:
        y = y[:, :, 0]
    return y.astype(x.dtype)


if __name__ == "__main__":
    key = jax.random.PRNGKey(0)
    kx, kw, kb, kx2 = jax.random.split(key, 4)

    # (N, C, L) case — BatchNorm1d(num_features=C) on a sequence input.
    N, C, L = 2, 4, 16
    x = jax.random.normal(kx, (N, C, L), dtype=jnp.float32)
    weight = 1.0 + 0.1 * jax.random.normal(kw, (C,), dtype=jnp.float32)
    bias = 0.1 * jax.random.normal(kb, (C,), dtype=jnp.float32)

    out = meta_batch_norm1d(x, weight, bias, eps=1e-5)
    out = jax.block_until_ready(out)
    ref = _reference_bn1d(x, weight, bias, eps=1e-5)
    assert out.shape == (N, C, L)
    assert jnp.max(jnp.abs(out - ref)) < 1e-4

    # (N, C) case — feature-vector input path.
    x2d = jax.random.normal(kx2, (8, C), dtype=jnp.float32)
    out2d = jax.block_until_ready(meta_batch_norm1d(x2d, weight, bias, eps=1e-5))
    ref2d = _reference_bn1d(x2d, weight, bias, eps=1e-5)
    assert out2d.shape == (8, C)
    assert jnp.max(jnp.abs(out2d - ref2d)) < 1e-4

    print("KERNEL_OK")
</pallas_src>

<mosaic_0001>
module attributes {stable_mosaic.version = 11 : i64} {
  func.func @_stats_kernel(%arg0: i32, %arg1: memref<2x4x16xf32, #tpu.memory_space<vmem>>, %arg2: memref<1x4x1xf32, #tpu.memory_space<vmem>>, %arg3: memref<1x4x1xf32, #tpu.memory_space<vmem>>) attributes {dimension_semantics = [#tpu.dimension_semantics<arbitrary>], iteration_bounds = array<i64: 1>, scalar_prefetch = 0 : i64, scratch_operands = 0 : i64, tpu.core_type = #tpu.core_type<tc>, window_params = [{transform_indices = @transform_0, window_bounds = array<i64: 2, 4, 16>}, {pipeline_mode = #tpu.pipeline_mode<synchronous>, transform_indices = @transform_1, window_bounds = array<i64: 1, 4, 1>}, {pipeline_mode = #tpu.pipeline_mode<synchronous>, transform_indices = @transform_2, window_bounds = array<i64: 1, 4, 1>}]} {
    %c0_i32 = arith.constant 0 : i32
    %0 = arith.cmpi eq, %arg0, %c0_i32 : i32
    %1 = arith.extui %0 : i1 to i32
    %c0_i32_0 = arith.constant 0 : i32
    %2 = arith.cmpi ne, %1, %c0_i32_0 : i32
    scf.if %2 {
      %cst_18 = arith.constant 0.000000e+00 : f32
      %19 = vector.broadcast %cst_18 : f32 to vector<1x4x1xf32>
      %c0_19 = arith.constant 0 : index
      %c0_20 = arith.constant 0 : index
      %c0_21 = arith.constant 0 : index
      %20 = vector.load %arg2[%c0_19, %c0_20, %c0_21] : memref<1x4x1xf32, #tpu.memory_space<vmem>>, vector<1x4x1xf32>
      tpu.vector_store %arg2[%c0_19, %c0_20, %c0_21], %19 {strides = array<i32>} : memref<1x4x1xf32, #tpu.memory_space<vmem>>, vector<1x4x1xf32>,
      %cst_22 = arith.constant 0.000000e+00 : f32
      %21 = vector.broadcast %cst_22 : f32 to vector<1x4x1xf32>
      %c0_23 = arith.constant 0 : index
      %c0_24 = arith.constant 0 : index
      %c0_25 = arith.constant 0 : index
      %22 = vector.load %arg3[%c0_23, %c0_24, %c0_25] : memref<1x4x1xf32, #tpu.memory_space<vmem>>, vector<1x4x1xf32>
      tpu.vector_store %arg3[%c0_23, %c0_24, %c0_25], %21 {strides = array<i32>} : memref<1x4x1xf32, #tpu.memory_space<vmem>>, vector<1x4x1xf32>,
    } else {
    }
    %c0 = arith.constant 0 : index
    %c0_1 = arith.constant 0 : index
    %c0_2 = arith.constant 0 : index
    %3 = vector.load %arg1[%c0, %c0_1, %c0_2] : memref<2x4x16xf32, #tpu.memory_space<vmem>>, vector<2x4x16xf32>
    %cst = arith.constant dense<0.000000e+00> : vector<2x4xf32>
    %4 = vector.multi_reduction <add>, %3, %cst [2] : vector<2x4x16xf32> to vector<2x4xf32>
    %5 = vector.shape_cast %4 : vector<2x4xf32> to vector<2x4x1xf32>
    %cst_3 = arith.constant dense<0.000000e+00> : vector<4x1xf32>
    %6 = vector.multi_reduction <add>, %5, %cst_3 [0] : vector<2x4x1xf32> to vector<4x1xf32>
    %7 = vector.shape_cast %6 : vector<4x1xf32> to vector<1x4x1xf32>
    %8 = arith.mulf %3, %3 : vector<2x4x16xf32>
    %cst_4 = arith.constant dense<0.000000e+00> : vector<2x4xf32>
    %9 = vector.multi_reduction <add>, %8, %cst_4 [2] : vector<2x4x16xf32> to vector<2x4xf32>
    %10 = vector.shape_cast %9 : vector<2x4xf32> to vector<2x4x1xf32>
    %cst_5 = arith.constant dense<0.000000e+00> : vector<4x1xf32>
    %11 = vector.multi_reduction <add>, %10, %cst_5 [0] : vector<2x4x1xf32> to vector<4x1xf32>
    %12 = vector.shape_cast %11 : vector<4x1xf32> to vector<1x4x1xf32>
    %c0_6 = arith.constant 0 : index
    %c0_7 = arith.constant 0 : index
    %c0_8 = arith.constant 0 : index
    %13 = vector.load %arg2[%c0_6, %c0_7, %c0_8] : memref<1x4x1xf32, #tpu.memory_space<vmem>>, vector<1x4x1xf32>
    %14 = arith.addf %13, %7 : vector<1x4x1xf32>
    %c0_9 = arith.constant 0 : index
    %c0_10 = arith.constant 0 : index
    %c0_11 = arith.constant 0 : index
    %15 = vector.load %arg2[%c0_9, %c0_10, %c0_11] : memref<1x4x1xf32, #tpu.memory_space<vmem>>, vector<1x4x1xf32>
    tpu.vector_store %arg2[%c0_9, %c0_10, %c0_11], %14 {strides = array<i32>} : memref<1x4x1xf32, #tpu.memory_space<vmem>>, vector<1x4x1xf32>,
    %c0_12 = arith.constant 0 : index
    %c0_13 = arith.constant 0 : index
    %c0_14 = arith.constant 0 : index
    %16 = vector.load %arg3[%c0_12, %c0_13, %c0_14] : memref<1x4x1xf32, #tpu.memory_space<vmem>>, vector<1x4x1xf32>
    %17 = arith.addf %16, %12 : vector<1x4x1xf32>
    %c0_15 = arith.constant 0 : index
    %c0_16 = arith.constant 0 : index
    %c0_17 = arith.constant 0 : index
    %18 = vector.load %arg3[%c0_15, %c0_16, %c0_17] : memref<1x4x1xf32, #tpu.memory_space<vmem>>, vector<1x4x1xf32>
    tpu.vector_store %arg3[%c0_15, %c0_16, %c0_17], %17 {strides = array<i32>} : memref<1x4x1xf32, #tpu.memory_space<vmem>>, vector<1x4x1xf32>,
    return
  }
  func.func @transform_0(%arg0: i32) -> (i32, i32, i32) {
    %c0_i32 = arith.constant 0 : i32
    %c0_i32_0 = arith.constant 0 : i32
    %c0_i32_1 = arith.constant 0 : i32
    return %arg0, %c0_i32, %c0_i32_0 : i32, i32, i32
  }
  func.func @transform_1(%arg0: i32) -> (i32, i32, i32) {
    %c0_i32 = arith.constant 0 : i32
    %c0_i32_0 = arith.constant 0 : i32
    %c0_i32_1 = arith.constant 0 : i32
    %c0_i32_2 = arith.constant 0 : i32
    return %c0_i32, %c0_i32_0, %c0_i32_1 : i32, i32, i32
  }
  func.func @transform_2(%arg0: i32) -> (i32, i32, i32) {
    %c0_i32 = arith.constant 0 : i32
    %c0_i32_0 = arith.constant 0 : i32
    %c0_i32_1 = arith.constant 0 : i32
    %c0_i32_2 = arith.constant 0 : i32
    return %c0_i32, %c0_i32_0, %c0_i32_1 : i32, i32, i32
  }
}

</mosaic_0001>

<llo_original>
// kernel: tpu_custom_call.1
$region0: #{tpu_custom_call.1}
  #allocation0 [shape = 'u32[]', space=smem, size = 0x4, offset = 0x4, fixed_abs, tag = 'smem constant byte address 0x4 - core index']
  #allocation1 [shape = 'u32[144,128]{1,0:T(1,128)}', space=vmem, size = 0x12000, scoped, tag = 'internal scratch']
  %s0 = inlined_call_operand.hbm [shape: f32[2,4,16], index: 0, kind: input, shape index: {}]
  %s1 = inlined_call_operand.vmem [shape: f32[1,4,1], index: 1, kind: output, shape index: {0}]
  %s2 = inlined_call_operand.vmem [shape: f32[1,4,1], index: 2, kind: output, shape index: {1}]
  %3 = xla_tuple %s1, %s2
  %s4 = sld [smem:[#allocation0]]
  $region30: #{tpu_custom_call.1} parent=0
    _
  %s6 = ssub.s32 1, %s4
  %s7 = scalar_select 0, %s6, %s4
  $region1: #{tpu_custom_call.1} parent=0
    #allocation2 [shape = 'u8[4096]{0}', space=vmem, size = 0x1000, scoped, tag = 'input window, operand 0, single buffered']
    #allocation3 [shape = 's32[1]{0}', space=sflag, size = 0x4, scoped, tag = 'scoped memory for tpu_custom_call.1']
    %8 = vsyncpa [#allocation3], 0
    // Predicated region
    $region2: #{tpu_custom_call.1} parent=1 // pred_check
      _
    $region3: #{tpu_custom_call.1} parent=1 // pred_check_branch
      %10 = sbr.rel (0) target = $region5
    $region4: #{tpu_custom_call.1} parent=1 // pred_region
      %s12 = ssub.s32 128, 128
      %13 = vsyncadd [#allocation3], %s12
      %s14 = sshll.u32 [#allocation2], 4
      %s15 = int_to_ptr.vmem [resolvable:$true] %s14
      %20 = dma.hbm_to_vmem [thread:$0]  %s0, 128, %s15, [#allocation3], 64, 64, 4
    $region5: #{tpu_custom_call.1} parent=1 // pred_fallthru
      _
    // Predicated region
    $region6: #{tpu_custom_call.1} parent=1 // pred_check
      _
    $region7: #{tpu_custom_call.1} parent=1 // pred_check_branch
      %22 = sbr.rel (0) target = $region9
    $region8: #{tpu_custom_call.1} parent=1 // pred_region
      %23 = dma.done [#allocation3], 128
    $region9: #{tpu_custom_call.1} parent=1 // pred_fallthru
      _
    %p24 = scmp.eq.s32.totalorder 0, 0
    // Predicated region
    $region10: #{tpu_custom_call.1} parent=1 // pred_check
      %p25 = pneg %p24
    $region11: #{tpu_custom_call.1} parent=1 // pred_check_branch
      %27 = sbr.rel (%p25) target = $region13
    $region12: #{tpu_custom_call.1} parent=1 // pred_region
      %vm28 = vcmask 3072
      %29 = vst.msk [vmem:[%s1] sm:$0xf] %vm28, 0.0
      %30 = vst.msk [vmem:[%s2] sm:$0xf] %vm28, 0.0
    $region13: #{tpu_custom_call.1} parent=1 // pred_fallthru
      _
    %v31 = vld [vmem:[#allocation2] sm:$0xf]
    %v32 = vld [vmem:[#allocation2 + $0x4] sm:$0xf]
    %vm33 = vcmask 125952
    %v34 = vsel %vm33, %v31, 0.0
    %35 = vadd.xlane.f32.xlu0 %v34
    %v36 = vpop.xlane.xlu0 %35
    %v37 = vsel %vm33, %v32, 0.0
    %38 = vadd.xlane.f32.xlu0 %v37
    %v39 = vpop.xlane.xlu0 %38
    %vm40 = vcmask 1043456
    %v41 = vsel %vm40, %v36, 0.0
    %v42 = vsel %vm40, %v39, 0.0
    %v43 = vadd.f32 %v41, %v42
    %v44 = vmul.f32 %v31, %v31
    %v45 = vmul.f32 %v32, %v32
    %v46 = vsel %vm33, %v44, 0.0
    %47 = vadd.xlane.f32.xlu0 %v46
    %v48 = vpop.xlane.xlu0 %47
    %v49 = vsel %vm33, %v45, 0.0
    %50 = vadd.xlane.f32.xlu0 %v49
    %v51 = vpop.xlane.xlu0 %50
    %v52 = vsel %vm40, %v48, 0.0
    %v53 = vsel %vm40, %v51, 0.0
    %v54 = vadd.f32 %v52, %v53
    %v55 = vld [vmem:[%s1] sm:$0xf]
    %v56 = vadd.f32 %v55, %v43
    %vm57 = vcmask 3072
    %58 = vst.msk [vmem:[%s1] sm:$0xf] %vm57, %v56
    %v59 = vld [vmem:[%s2] sm:$0xf]
    %v60 = vadd.f32 %v59, %v54
    %61 = vst.msk [vmem:[%s2] sm:$0xf] %vm57, %v60
    // Predicated region
    $region14: #{tpu_custom_call.1} parent=1 // pred_check
      _
    $region15: #{tpu_custom_call.1} parent=1 // pred_check_branch
      %63 = sbr.rel (0) target = $region17
    $region16: #{tpu_custom_call.1} parent=1 // pred_region
      _
    $region17: #{tpu_custom_call.1} parent=1 // pred_fallthru
      _
    // Predicated region
    $region18: #{tpu_custom_call.1} parent=1 // pred_check
      _
    $region19: #{tpu_custom_call.1} parent=1 // pred_check_branch
      %65 = sbr.rel (0) target = $region21
    $region20: #{tpu_custom_call.1} parent=1 // pred_region
      _
    $region21: #{tpu_custom_call.1} parent=1 // pred_fallthru
      _
    // Predicated region
    $region22: #{tpu_custom_call.1} parent=1 // pred_check
      _
    $region23: #{tpu_custom_call.1} parent=1 // pred_check_branch
      %67 = sbr.rel (0) target = $region25
    $region24: #{tpu_custom_call.1} parent=1 // pred_region
      _
    $region25: #{tpu_custom_call.1} parent=1 // pred_fallthru
      _
    // Predicated region
    $region26: #{tpu_custom_call.1} parent=1 // pred_check
      _
    $region27: #{tpu_custom_call.1} parent=1 // pred_check_branch
      %69 = sbr.rel (0) target = $region29
    $region28: #{tpu_custom_call.1} parent=1 // pred_region
      _
    $region29: #{tpu_custom_call.1} parent=1 // pred_fallthru
      _
    %70 = vsyncpa [#allocation3], 1

</llo_original>
